<compile_context>
chip_gen: v7x
topology: tpu7x:2x2x1
jax: 0.10.0
libtpu: 0.0.40
codegen_flags: <defaults>
</compile_context>

<pallas_src>
import jax
import jax.numpy as jnp
from jax.experimental import pallas as pl
from jax.experimental.pallas import tpu as pltpu


def _round_up(x, m):
    return (x + m - 1) // m * m


def _sublane_multiple(dtype):
    # f32 -> 8, bf16 -> 16, int8/fp8 -> 32 rows per native sublane tile.
    return {4: 8, 2: 16, 1: 32}.get(jnp.dtype(dtype).itemsize, 8)


def _vmem_budget():
    """(vmem_limit_bytes, x_tile_budget_bytes) — generation aware."""
    cap = 64 * 1024 * 1024
    try:
        cap = int(getattr(pltpu.get_tpu_info(), "vmem_capacity_bytes", cap))
    except Exception:
        pass
    if cap > 96 * 1024 * 1024:                      # v5e / v6e: 128 MiB VMEM
        return 64 * 1024 * 1024, 16 * 1024 * 1024
    return 36 * 1024 * 1024, 8 * 1024 * 1024        # v7x-class: 64 MiB per TC


# ----------------------------- kernels ------------------------------------ #

def basicnet_kernel_fused(x_ref, w1_ref, b1_ref, w2_ref, b2_ref, o_ref):
    # x_ref : (TB, Cp, WH)  feature tile — spatial on lanes, channels on sublanes
    # w1_ref: (Cp, Hp)      v2hid weight, pre-scaled by 1/(W*H)
    # b1_ref: (1, Hp); w2_ref: (Hp, Ap); b2_ref: (1, Ap); o_ref: (TB, Ap)
    gf = jnp.sum(x_ref[...].astype(jnp.float32), axis=-1)        # avg-pool (sum part)
    h = jnp.dot(gf, w1_ref[...], preferred_element_type=jnp.float32) + b1_ref[...]
    h = jnp.where(h > 0, h, 0.1 * h)                              # LeakyReLU(0.1)
    v2s = jnp.dot(h, w2_ref[...], preferred_element_type=jnp.float32) + b2_ref[...]
    o_ref[...] = v2s.astype(o_ref.dtype)


def basicnet_kernel_chunked(x_ref, w1_ref, b1_ref, w2_ref, b2_ref, o_ref, h_acc):
    # Channels chunked on grid axis 1 ("arbitrary"); h_acc (TB, Hp) f32 carries
    # the matmul-#1 partial sum across channel chunks.
    j = pl.program_id(1)

    @pl.when(j == 0)
    def _():
        h_acc[...] = jnp.zeros_like(h_acc)

    gf = jnp.sum(x_ref[...].astype(jnp.float32), axis=-1)         # (TB, c_chunk)
    h_acc[...] += jnp.dot(gf, w1_ref[...], preferred_element_type=jnp.float32)

    @pl.when(j == pl.num_programs(1) - 1)
    def _():
        h = h_acc[...] + b1_ref[...]
        h = jnp.where(h > 0, h, 0.1 * h)
        v2s = jnp.dot(h, w2_ref[...], preferred_element_type=jnp.float32) + b2_ref[...]
        o_ref[...] = v2s.astype(o_ref.dtype)


# ----------------------------- tiling ------------------------------------- #

def _choose_batch_tile(b_pad):
    # Small batch tiles: keeps (tb, C) f32 partials tiny and gives the v7x
    # megacore >= 2 steps on the parallel axis whenever b_pad allows it.
    return b_pad if b_pad < 16 else 8


def _choose_c_chunk(c_pad, tb, wh, x_bytes, sub, budget):
    # Largest channel chunk whose double-buffered x block fits the budget.
    def blk(c):
        return 2 * tb * c * wh * x_bytes
    if blk(c_pad) <= budget:
        return c_pad
    c = c_pad
    while c % 2 == 0 and c // 2 >= sub:
        c //= 2
        if c % sub == 0 and blk(c) <= budget:
            return c
    return c_pad   # cannot chunk cleanly; rely on vmem_limit headroom


# ----------------------------- wrapper ------------------------------------ #

def basicnet_forward(x_nchw, support_att, w1, b1, w2, b2):
    """BasicNet.forward (backbone treated as identity). `support_att` is
    accepted (as in the PyTorch signature) but unused by forward()."""
    del support_att
    B, C, W, H = x_nchw.shape
    WH = W * H
    hid = w1.shape[1]
    attr = w2.shape[1]
    x_bytes = jnp.dtype(x_nchw.dtype).itemsize
    out_dtype = w1.dtype                     # param dtype (f32) — PyTorch parity

    sub = _sublane_multiple(x_nchw.dtype)
    vmem_limit, x_budget = _vmem_budget()

    # Free reshape: NCHW -> (B, C, W*H). Spatial -> lanes, channels -> sublanes.
    x = x_nchw.reshape(B, C, WH)

    # Only batch/channel sublane round-ups (no transpose, no lane padding).
    # This is a no-op whenever B and C are already aligned (the usual case).
    b_pad = _round_up(B, 8)
    c_pad = _round_up(C, sub)
    if (b_pad, c_pad) != (B, C):
        x = jnp.pad(x, ((0, b_pad - B), (0, c_pad - C), (0, 0)))

    tb = _choose_batch_tile(b_pad)
    n_b = b_pad // tb
    c_chunk = _choose_c_chunk(c_pad, tb, WH, x_bytes, sub, x_budget)
    n_c = c_pad // c_chunk

    # Parameters (tiny): fold 1/(W*H) into W1; lane-pad hid/attr to 128.
    # Zero padding is mathematically inert (padded channels/hid/attr give 0).
    hid_pad = _round_up(hid, 128)
    attr_pad = _round_up(attr, 128)
    w1p = jnp.pad(w1.astype(jnp.float32) * (1.0 / WH),
                  ((0, c_pad - C), (0, hid_pad - hid)))
    b1p = jnp.pad(b1.astype(jnp.float32).reshape(1, -1), ((0, 0), (0, hid_pad - hid)))
    w2p = jnp.pad(w2.astype(jnp.float32), ((0, hid_pad - hid), (0, attr_pad - attr)))
    b2p = jnp.pad(b2.astype(jnp.float32).reshape(1, -1), ((0, 0), (0, attr_pad - attr)))

    flops = (b_pad * c_pad * WH                       # pooling reduce
             + 2 * b_pad * c_pad * hid_pad            # matmul #1
             + 2 * b_pad * hid_pad * attr_pad)        # matmul #2
    bytes_accessed = (x.size * x_bytes
                      + (w1p.size + b1p.size + w2p.size + b2p.size) * 4
                      + b_pad * attr_pad * jnp.dtype(out_dtype).itemsize)
    cost = pl.CostEstimate(flops=int(flops), transcendentals=0,
                           bytes_accessed=int(bytes_accessed))

    if n_c == 1:
        # Single pass: full (C, WH) slab per batch tile — no reduction axis,
        # no scratch accumulator, no init/epilogue gating.
        out_padded = pl.pallas_call(
            basicnet_kernel_fused,
            out_shape=jax.ShapeDtypeStruct((b_pad, attr_pad), out_dtype),
            grid_spec=pltpu.PrefetchScalarGridSpec(
                num_scalar_prefetch=0,
                grid=(n_b,),
                in_specs=[
                    pl.BlockSpec((tb, c_pad, WH), lambda i: (i, 0, 0)),     # features
                    pl.BlockSpec((c_pad, hid_pad), lambda i: (0, 0)),       # resident W1
                    pl.BlockSpec((1, hid_pad), lambda i: (0, 0)),           # resident b1
                    pl.BlockSpec((hid_pad, attr_pad), lambda i: (0, 0)),    # resident W2
                    pl.BlockSpec((1, attr_pad), lambda i: (0, 0)),          # resident b2
                ],
                out_specs=pl.BlockSpec((tb, attr_pad), lambda i: (i, 0)),
            ),
            compiler_params=pltpu.CompilerParams(
                dimension_semantics=("parallel",),
                vmem_limit_bytes=vmem_limit),
            cost_estimate=cost,
        )(x, w1p, b1p, w2p, b2p)
    else:
        # Large C: chunk channels on an "arbitrary" axis; accumulate matmul-#1
        # partials in a small (tb, hid_pad) f32 scratch.
        out_padded = pl.pallas_call(
            basicnet_kernel_chunked,
            out_shape=jax.ShapeDtypeStruct((b_pad, attr_pad), out_dtype),
            grid_spec=pltpu.PrefetchScalarGridSpec(
                num_scalar_prefetch=0,
                grid=(n_b, n_c),
                in_specs=[
                    pl.BlockSpec((tb, c_chunk, WH), lambda i, j: (i, j, 0)),
                    pl.BlockSpec((c_chunk, hid_pad), lambda i, j: (j, 0)),
                    pl.BlockSpec((1, hid_pad), lambda i, j: (0, 0)),
                    pl.BlockSpec((hid_pad, attr_pad), lambda i, j: (0, 0)),
                    pl.BlockSpec((1, attr_pad), lambda i, j: (0, 0)),
                ],
                out_specs=pl.BlockSpec((tb, attr_pad), lambda i, j: (i, 0)),
                scratch_shapes=[pltpu.VMEM((tb, hid_pad), jnp.float32)],
            ),
            compiler_params=pltpu.CompilerParams(
                dimension_semantics=("parallel", "arbitrary"),
                vmem_limit_bytes=vmem_limit),
            cost_estimate=cost,
        )(x, w1p, b1p, w2p, b2p)

    return out_padded[:B, :attr]


def reference_forward(x_nchw, w1, b1, w2, b2):
    gf = jnp.mean(x_nchw.astype(jnp.float32), axis=(2, 3))
    h = gf @ w1.astype(jnp.float32) + b1.astype(jnp.float32)
    h = jnp.where(h > 0, h, 0.1 * h)
    return h @ w2.astype(jnp.float32) + b2.astype(jnp.float32)


if __name__ == "__main__":
    # Small shapes consistent with the module:
    #   feat_channel c = 4, feat_w = feat_h = 16, hid_dim = 32,
    #   attritube_num = 12, cls_num = 10, ucls_num = 2, batch = 2.
    B, C, W, H = 2, 4, 16, 16
    hid_dim = 32
    attritube_num = 12
    cls_num, ucls_num = 10, 2

    key = jax.random.PRNGKey(0)
    kx, ks, kw1, kb1, kw2, kb2 = jax.random.split(key, 6)

    # Deterministic "feature map" input (backbone treated as identity).
    x = jax.random.normal(kx, (B, C, W, H), dtype=jnp.float32)
    support_att = jax.random.normal(ks, (cls_num, attritube_num), dtype=jnp.float32)

    # Deterministic parameter init (nn.Linear-style uniform bounds), stored (in, out).
    bnd1 = 1.0 / (C ** 0.5)
    w1 = jax.random.uniform(kw1, (C, hid_dim), jnp.float32, -bnd1, bnd1)
    b1 = jax.random.uniform(kb1, (1, hid_dim), jnp.float32, -bnd1, bnd1)
    bnd2 = 1.0 / (hid_dim ** 0.5)
    w2 = jax.random.uniform(kw2, (hid_dim, attritube_num), jnp.float32, -bnd2, bnd2)
    b2 = jax.random.uniform(kb2, (1, attritube_num), jnp.float32, -bnd2, bnd2)

    out = basicnet_forward(x, support_att, w1, b1, w2, b2)
    out = jax.block_until_ready(out)

    ref = reference_forward(x, w1, b1, w2, b2)
    assert out.shape == (B, attritube_num), out.shape
    assert out.dtype == jnp.float32, out.dtype
    assert jnp.allclose(out, ref, atol=1e-5, rtol=1e-5), "mismatch vs reference"

    print("KERNEL_OK")
</pallas_src>

<mosaic_0001>
module attributes {stable_mosaic.version = 11 : i64} {
  func.func @basicnet_kernel_fused(%arg0: i32, %arg1: memref<8x8x256xf32, #tpu.memory_space<vmem>>, %arg2: memref<8x128xf32, #tpu.memory_space<vmem>>, %arg3: memref<1x128xf32, #tpu.memory_space<vmem>>, %arg4: memref<128x128xf32, #tpu.memory_space<vmem>>, %arg5: memref<1x128xf32, #tpu.memory_space<vmem>>, %arg6: memref<8x128xf32, #tpu.memory_space<vmem>>) attributes {dimension_semantics = [#tpu.dimension_semantics<parallel>], iteration_bounds = array<i64: 1>, scalar_prefetch = 0 : i64, scratch_operands = 0 : i64, tpu.core_type = #tpu.core_type<tc>, window_params = [{transform_indices = @transform_0, window_bounds = array<i64: 8, 8, 256>}, {pipeline_mode = #tpu.pipeline_mode<synchronous>, transform_indices = @transform_1, window_bounds = array<i64: 8, 128>}, {pipeline_mode = #tpu.pipeline_mode<synchronous>, transform_indices = @transform_2, window_bounds = array<i64: 1, 128>}, {pipeline_mode = #tpu.pipeline_mode<synchronous>, transform_indices = @transform_3, window_bounds = array<i64: 128, 128>}, {pipeline_mode = #tpu.pipeline_mode<synchronous>, transform_indices = @transform_4, window_bounds = array<i64: 1, 128>}, {transform_indices = @transform_5, window_bounds = array<i64: 8, 128>}]} {
    %c0 = arith.constant 0 : index
    %c0_0 = arith.constant 0 : index
    %c0_1 = arith.constant 0 : index
    %0 = vector.load %arg1[%c0, %c0_0, %c0_1] : memref<8x8x256xf32, #tpu.memory_space<vmem>>, vector<8x8x256xf32>
    %cst = arith.constant dense<0.000000e+00> : vector<8x8xf32>
    %1 = vector.multi_reduction <add>, %0, %cst [2] : vector<8x8x256xf32> to vector<8x8xf32>
    %c0_2 = arith.constant 0 : index
    %c0_3 = arith.constant 0 : index
    %2 = vector.load %arg2[%c0_2, %c0_3] : memref<8x128xf32, #tpu.memory_space<vmem>>, vector<8x128xf32>
    %cst_4 = arith.constant dense<0.000000e+00> : vector<8x128xf32>
    %3 = tpu.matmul %1, %2, %cst_4 {dimension_numbers = #tpu.dot_dimension_numbers<[1], [0], [0], [1], [0, 0, 1, 1], [], []>} : vector<8x8xf32>, vector<8x128xf32>, vector<8x128xf32> -> vector<8x128xf32>
    %c0_5 = arith.constant 0 : index
    %c0_6 = arith.constant 0 : index
    %4 = vector.load %arg3[%c0_5, %c0_6] : memref<1x128xf32, #tpu.memory_space<vmem>>, vector<1x128xf32>
    %5 = vector.broadcast %4 : vector<1x128xf32> to vector<8x128xf32>
    %6 = arith.addf %3, %5 : vector<8x128xf32>
    %cst_7 = arith.constant 0.000000e+00 : f32
    %7 = vector.broadcast %cst_7 : f32 to vector<8x128xf32>
    %8 = arith.cmpf ogt, %6, %7 : vector<8x128xf32>
    %cst_8 = arith.constant 1.000000e-01 : f32
    %9 = vector.broadcast %cst_8 : f32 to vector<8x128xf32>
    %10 = arith.mulf %9, %6 : vector<8x128xf32>
    %11 = arith.select %8, %6, %10 : vector<8x128xi1>, vector<8x128xf32>
    %c0_9 = arith.constant 0 : index
    %c0_10 = arith.constant 0 : index
    %12 = vector.load %arg4[%c0_9, %c0_10] : memref<128x128xf32, #tpu.memory_space<vmem>>, vector<128x128xf32>
    %cst_11 = arith.constant dense<0.000000e+00> : vector<8x128xf32>
    %13 = tpu.matmul %11, %12, %cst_11 {dimension_numbers = #tpu.dot_dimension_numbers<[1], [0], [0], [1], [0, 0, 1, 1], [], []>} : vector<8x128xf32>, vector<128x128xf32>, vector<8x128xf32> -> vector<8x128xf32>
    %c0_12 = arith.constant 0 : index
    %c0_13 = arith.constant 0 : index
    %14 = vector.load %arg5[%c0_12, %c0_13] : memref<1x128xf32, #tpu.memory_space<vmem>>, vector<1x128xf32>
    %15 = vector.broadcast %14 : vector<1x128xf32> to vector<8x128xf32>
    %16 = arith.addf %13, %15 : vector<8x128xf32>
    %c0_14 = arith.constant 0 : index
    %c0_15 = arith.constant 0 : index
    %17 = vector.load %arg6[%c0_14, %c0_15] : memref<8x128xf32, #tpu.memory_space<vmem>>, vector<8x128xf32>
    tpu.vector_store %arg6[%c0_14, %c0_15], %16 {strides = array<i32>} : memref<8x128xf32, #tpu.memory_space<vmem>>, vector<8x128xf32>,
    return
  }
  func.func @transform_0(%arg0: i32) -> (i32, i32, i32) {
    %c0_i32 = arith.constant 0 : i32
    %c0_i32_0 = arith.constant 0 : i32
    %c0_i32_1 = arith.constant 0 : i32
    return %arg0, %c0_i32, %c0_i32_0 : i32, i32, i32
  }
  func.func @transform_1(%arg0: i32) -> (i32, i32) {
    %c0_i32 = arith.constant 0 : i32
    %c0_i32_0 = arith.constant 0 : i32
    %c0_i32_1 = arith.constant 0 : i32
    return %c0_i32, %c0_i32_0 : i32, i32
  }
  func.func @transform_2(%arg0: i32) -> (i32, i32) {
    %c0_i32 = arith.constant 0 : i32
    %c0_i32_0 = arith.constant 0 : i32
    %c0_i32_1 = arith.constant 0 : i32
    return %c0_i32, %c0_i32_0 : i32, i32
  }
  func.func @transform_3(%arg0: i32) -> (i32, i32) {
    %c0_i32 = arith.constant 0 : i32
    %c0_i32_0 = arith.constant 0 : i32
    %c0_i32_1 = arith.constant 0 : i32
    return %c0_i32, %c0_i32_0 : i32, i32
  }
  func.func @transform_4(%arg0: i32) -> (i32, i32) {
    %c0_i32 = arith.constant 0 : i32
    %c0_i32_0 = arith.constant 0 : i32
    %c0_i32_1 = arith.constant 0 : i32
    return %c0_i32, %c0_i32_0 : i32, i32
  }
  func.func @transform_5(%arg0: i32) -> (i32, i32) {
    %c0_i32 = arith.constant 0 : i32
    %c0_i32_0 = arith.constant 0 : i32
    return %arg0, %c0_i32 : i32, i32
  }
}

</mosaic_0001>

<llo_original>
// kernel: tpu_custom_call.1
$region0: #{tpu_custom_call.1}
  #allocation0 [shape = 'u32[]', space=smem, size = 0x4, offset = 0x4, fixed_abs, tag = 'smem constant byte address 0x4 - core index']
  #allocation1 [shape = 'u32[144,128]{1,0:T(1,128)}', space=vmem, size = 0x12000, scoped, tag = 'internal scratch']
  %s0 = inlined_call_operand.hbm [shape: f32[8,8,256], index: 0, kind: input, shape index: {}]
  %s1 = inlined_call_operand.hbm [shape: f32[8,128], index: 1, kind: input, shape index: {}]
  %s2 = inlined_call_operand.vmem [shape: f32[1,128], index: 2, kind: input, shape index: {}]
  %s3 = inlined_call_operand.hbm [shape: f32[128,128], index: 3, kind: input, shape index: {}]
  %s4 = inlined_call_operand.vmem [shape: f32[1,128], index: 4, kind: input, shape index: {}]
  %s5 = inlined_call_operand.hbm [shape: f32[8,128], index: 5, kind: output, shape index: {}]
  %s6 = sld [smem:[#allocation0]]
  $region42: #{tpu_custom_call.1} parent=0
    _
  %s8 = ssub.s32 1, %s6
  %s9 = scalar_select 0, %s8, %s6
  $region1: #{tpu_custom_call.1} parent=0
    #allocation2 [shape = 'u8[65536]{0}', space=vmem, size = 0x10000, scoped, tag = 'input window, operand 0, single buffered']
    #allocation3 [shape = 's32[1]{0}', space=sflag, size = 0x4, scoped, tag = 'scoped memory for tpu_custom_call.1']
    #allocation4 [shape = 's32[1]{0}', space=sflag, size = 0x4, scoped, tag = 'scoped memory for tpu_custom_call.1']
    #allocation5 [shape = 'u8[4096]{0}', space=vmem, size = 0x1000, scoped, tag = 'input window, operand 1, single buffered']
    #allocation6 [shape = 's32[1]{0}', space=sflag, size = 0x4, scoped, tag = 'scoped memory for tpu_custom_call.1']
    #allocation7 [shape = 'u8[65536]{0}', space=vmem, size = 0x10000, scoped, tag = 'input window, operand 3, single buffered']
    #allocation8 [shape = 'u8[4096]{0}', space=vmem, size = 0x1000, scoped, tag = 'output window, operand 0, single buffered']
    %10 = vsyncpa [#allocation3], 0
    %11 = vsyncpa [#allocation6], 0
    %12 = vsyncpa [#allocation4], 0
    // Predicated region
    $region2: #{tpu_custom_call.1} parent=1 // pred_check
      _
    $region3: #{tpu_custom_call.1} parent=1 // pred_check_branch
      %14 = sbr.rel (0) target = $region5
    $region4: #{tpu_custom_call.1} parent=1 // pred_region
      %s16 = ssub.s32 2048, 2048
      %17 = vsyncadd [#allocation3], %s16
      %s18 = sshll.u32 [#allocation2], 4
      %s19 = int_to_ptr.vmem [resolvable:$true] %s18
      %24 = dma.hbm_to_vmem [thread:$0]  %s0, 2048, %s19, [#allocation3], 256, 256, 16
    $region5: #{tpu_custom_call.1} parent=1 // pred_fallthru
      _
    // Predicated region
    $region6: #{tpu_custom_call.1} parent=1 // pred_check
      _
    $region7: #{tpu_custom_call.1} parent=1 // pred_check_branch
      %26 = sbr.rel (0) target = $region9
    $region8: #{tpu_custom_call.1} parent=1 // pred_region
      %s28 = ssub.s32 128, 128
      %29 = vsyncadd [#allocation6], %s28
      %s31 = sshll.u32 [#allocation5], 4
      %s32 = int_to_ptr.vmem [resolvable:$true] %s31
      %34 = dma.hbm_to_vmem [thread:$0]  %s1, 128, %s32, [#allocation6]
    $region9: #{tpu_custom_call.1} parent=1 // pred_fallthru
      _
    // Predicated region
    $region10: #{tpu_custom_call.1} parent=1 // pred_check
      _
    $region11: #{tpu_custom_call.1} parent=1 // pred_check_branch
      %36 = sbr.rel (0) target = $region13
    $region12: #{tpu_custom_call.1} parent=1 // pred_region
      _
    $region13: #{tpu_custom_call.1} parent=1 // pred_fallthru
      _
    // Predicated region
    $region14: #{tpu_custom_call.1} parent=1 // pred_check
      _
    $region15: #{tpu_custom_call.1} parent=1 // pred_check_branch
      %38 = sbr.rel (0) target = $region17
    $region16: #{tpu_custom_call.1} parent=1 // pred_region
      %s40 = ssub.s32 2048, 2048
      %41 = vsyncadd [#allocation6], %s40
      %s42 = sshll.u32 [#allocation7], 4
      %s43 = int_to_ptr.vmem [resolvable:$true] %s42
      %48 = dma.hbm_to_vmem [thread:$0]  %s3, 2048, %s43, [#allocation6], 128, 128, 8
    $region17: #{tpu_custom_call.1} parent=1 // pred_fallthru
      _
    // Predicated region
    $region18: #{tpu_custom_call.1} parent=1 // pred_check
      _
    $region19: #{tpu_custom_call.1} parent=1 // pred_check_branch
      %50 = sbr.rel (0) target = $region21
    $region20: #{tpu_custom_call.1} parent=1 // pred_region
      _
    $region21: #{tpu_custom_call.1} parent=1 // pred_fallthru
      _
    // Predicated region
    $region22: #{tpu_custom_call.1} parent=1 // pred_check
      _
    $region23: #{tpu_custom_call.1} parent=1 // pred_check_branch
      %52 = sbr.rel (0) target = $region25
    $region24: #{tpu_custom_call.1} parent=1 // pred_region
      %53 = dma.done [#allocation3], 2048
    $region25: #{tpu_custom_call.1} parent=1 // pred_fallthru
      _
    // Predicated region
    $region26: #{tpu_custom_call.1} parent=1 // pred_check
      _
    $region27: #{tpu_custom_call.1} parent=1 // pred_check_branch
      %55 = sbr.rel (0) target = $region29
    $region28: #{tpu_custom_call.1} parent=1 // pred_region
      %56 = dma.done [#allocation6], 128
    $region29: #{tpu_custom_call.1} parent=1 // pred_fallthru
      _
    // Predicated region
    $region30: #{tpu_custom_call.1} parent=1 // pred_check
      _
    $region31: #{tpu_custom_call.1} parent=1 // pred_check_branch
      %58 = sbr.rel (0) target = $region33
    $region32: #{tpu_custom_call.1} parent=1 // pred_region
      %59 = dma.done [#allocation6], 2048
    $region33: #{tpu_custom_call.1} parent=1 // pred_fallthru
      _
    %v60 = vld [vmem:[#allocation2] sm:$0xff]
    %v61 = vld [vmem:[#allocation2 + $0x8] sm:$0xff]
    %v62 = vld [vmem:[#allocation2 + $0x10] sm:$0xff]
    %v63 = vld [vmem:[#allocation2 + $0x18] sm:$0xff]
    %v64 = vld [vmem:[#allocation2 + $0x20] sm:$0xff]
    %v65 = vld [vmem:[#allocation2 + $0x28] sm:$0xff]
    %v66 = vld [vmem:[#allocation2 + $0x30] sm:$0xff]
    %v67 = vld [vmem:[#allocation2 + $0x38] sm:$0xff]
    %v68 = vld [vmem:[#allocation2 + $0x40] sm:$0xff]
    %v69 = vld [vmem:[#allocation2 + $0x48] sm:$0xff]
    %v70 = vld [vmem:[#allocation2 + $0x50] sm:$0xff]
    %v71 = vld [vmem:[#allocation2 + $0x58] sm:$0xff]
    %v72 = vld [vmem:[#allocation2 + $0x60] sm:$0xff]
    %v73 = vld [vmem:[#allocation2 + $0x68] sm:$0xff]
    %v74 = vld [vmem:[#allocation2 + $0x70] sm:$0xff]
    %v75 = vld [vmem:[#allocation2 + $0x78] sm:$0xff]
    %v76 = vadd.f32 %v60, %v61
    %77 = vadd.xlane.f32.xlu0 %v76
    %v78 = vpop.xlane.xlu0 %77
    %v79 = vadd.f32 %v62, %v63
    %80 = vadd.xlane.f32.xlu0 %v79
    %v81 = vpop.xlane.xlu0 %80
    %v82 = vadd.f32 %v64, %v65
    %83 = vadd.xlane.f32.xlu0 %v82
    %v84 = vpop.xlane.xlu0 %83
    %v85 = vadd.f32 %v66, %v67
    %86 = vadd.xlane.f32.xlu0 %v85
    %v87 = vpop.xlane.xlu0 %86
    %v88 = vadd.f32 %v68, %v69
    %89 = vadd.xlane.f32.xlu0 %v88
    %v90 = vpop.xlane.xlu0 %89
    %v91 = vadd.f32 %v70, %v71
    %92 = vadd.xlane.f32.xlu0 %v91
    %v93 = vpop.xlane.xlu0 %92
    %v94 = vadd.f32 %v72, %v73
    %95 = vadd.xlane.f32.xlu0 %v94
    %v96 = vpop.xlane.xlu0 %95
    %v97 = vadd.f32 %v74, %v75
    %98 = vadd.xlane.f32.xlu0 %v97
    %v99 = vpop.xlane.xlu0 %98
    %v100 = vld [vmem:[#allocation5] sm:$0xff]
    %v101 = vld [vmem:[%s2] sm:$0x1]
    %v103 = vlaneseq
    %v104 = vshrl.u32 %v103, 7
    %v105 = vsub.s32 0, %v104
    %v106 = vrot.slane %v101, %v105
    %v116 = vlaneseq
    %v117 = vand.u32 %v116, 127
    %v118 = vlaneseq
    %v119 = vshrl.u32 %v118, 7
    %v120 = vsub.s32 %v117, %v119
    %v121 = vrot.slane %v78, %v120
    %v122 = vlaneseq
    %v123 = vshrl.u32 %v122, 7
    %v124 = vsub.s32 %v117, %v123
    %v125 = vrot.slane %v81, %v124
    %v126 = vlaneseq
    %v127 = vshrl.u32 %v126, 7
    %v128 = vsub.s32 %v117, %v127
    %v129 = vrot.slane %v84, %v128
    %v130 = vlaneseq
    %v131 = vshrl.u32 %v130, 7
    %v132 = vsub.s32 %v117, %v131
    %v133 = vrot.slane %v87, %v132
    %v134 = vlaneseq
    %v135 = vshrl.u32 %v134, 7
    %v136 = vsub.s32 %v117, %v135
    %v137 = vrot.slane %v90, %v136
    %v138 = vlaneseq
    %v139 = vshrl.u32 %v138, 7
    %v140 = vsub.s32 %v117, %v139
    %v141 = vrot.slane %v93, %v140
    %v142 = vlaneseq
    %v143 = vshrl.u32 %v142, 7
    %v144 = vsub.s32 %v117, %v143
    %v145 = vrot.slane %v96, %v144
    %v146 = vlaneseq
    %v147 = vshrl.u32 %v146, 7
    %v148 = vsub.s32 %v117, %v147
    %v149 = vrot.slane %v99, %v148
    %vm150 = vcmask 1041409
    %v151 = vsel %vm150, %v125, %v121
    %vm152 = vcmask 1042434
    %v153 = vsel %vm152, %v129, %v151
    %vm154 = vcmask 1043459
    %v155 = vsel %vm154, %v133, %v153
    %vm156 = vcmask 1044484
    %v157 = vsel %vm156, %v137, %v155
    %vm158 = vcmask 1045509
    %v159 = vsel %vm158, %v141, %v157
    %vm160 = vcmask 1046534
    %v161 = vsel %vm160, %v145, %v159
    %vm162 = vcmask 1047559
    %v163 = vsel %vm162, %v149, %v161
    %vm164 = vcmask 64512
    %v165 = vsel %vm164, %v163, 0
    %167 = vmatprep.subr.mxu0 0.0
    %168 = vmatpush1.msra.mxu0 %v100
    %169 = vmatprep.subr.mxu0 0.0
    %170 = vmatpush1.msra.mxu0 0.0
    %171 = vmatprep.subr.mxu0 0.0
    %172 = vmatpush1.msra.mxu0 0.0
    %173 = vmatprep.subr.mxu0 0.0
    %174 = vmatpush1.msra.mxu0 0.0
    %175 = vmatprep.subr.mxu0 0.0
    %176 = vmatpush1.msra.mxu0 0.0
    %177 = vmatprep.subr.mxu0 0.0
    %178 = vmatpush1.msra.mxu0 0.0
    %179 = vmatprep.subr.mxu0 0.0
    %180 = vmatpush1.msra.mxu0 0.0
    %181 = vmatprep.subr.mxu0 0.0
    %182 = vmatpush1.msra.mxu0 0.0
    %183 = vmatprep.subr.mxu0 0.0
    %184 = vmatpush1.msra.mxu0 0.0
    %185 = vmatprep.subr.mxu0 0.0
    %186 = vmatpush1.msra.mxu0 0.0
    %187 = vmatprep.subr.mxu0 0.0
    %188 = vmatpush1.msra.mxu0 0.0
    %189 = vmatprep.subr.mxu0 0.0
    %190 = vmatpush1.msra.mxu0 0.0
    %191 = vmatprep.subr.mxu0 0.0
    %192 = vmatpush1.msra.mxu0 0.0
    %193 = vmatprep.subr.mxu0 0.0
    %194 = vmatpush1.msra.mxu0 0.0
    %195 = vmatprep.subr.mxu0 0.0
    %196 = vmatpush1.msra.mxu0 0.0
    %197 = vmatprep.subr.mxu0 0.0
    %198 = vmatpush1.msra.mxu0 0.0
    %199 = vmatprep.subr.mxu0 0.0
    %200 = vmatpush1.msra.mxu0 0.0
    %201 = vmatprep.subr.mxu0 0.0
    %202 = vmatpush1.msra.mxu0 0.0
    %203 = vmatprep.subr.mxu0 0.0
    %204 = vmatpush1.msra.mxu0 0.0
    %205 = vmatprep.subr.mxu0 0.0
    %206 = vmatpush1.msra.mxu0 0.0
    %207 = vmatprep.subr.mxu0 0.0
    %208 = vmatpush1.msra.mxu0 0.0
    %209 = vmatprep.subr.mxu0 0.0
    %210 = vmatpush1.msra.mxu0 0.0
    %211 = vmatprep.subr.mxu0 0.0
    %212 = vmatpush1.msra.mxu0 0.0
    %213 = vmatprep.subr.mxu0 0.0
    %214 = vmatpush1.msra.mxu0 0.0
    %215 = vmatprep.subr.mxu0 0.0
    %216 = vmatpush1.msra.mxu0 0.0
    %217 = vmatprep.subr.mxu0 0.0
    %218 = vmatpush1.msra.mxu0 0.0
    %219 = vmatprep.subr.mxu0 0.0
    %220 = vmatpush1.msra.mxu0 0.0
    %221 = vmatprep.subr.mxu0 0.0
    %222 = vmatpush1.msra.mxu0 0.0
    %223 = vmatprep.subr.mxu0 0.0
    %224 = vmatpush1.msra.mxu0 0.0
    %225 = vmatprep.subr.mxu0 0.0
    %226 = vmatpush1.msra.mxu0 0.0
    %227 = vmatprep.subr.mxu0 0.0
    %228 = vmatpush1.msra.mxu0 0.0
    %229 = vmatprep.subr.mxu0 0.0
    %230 = vmatpush1.msra.mxu0 0.0
    %231 = vmatprep.mubr.f32.mxu0 0.0
    %232 = vmatmul.mubr.f32.gmra.mrb[0].mxu0 %v165
    %v233 = vpop.f32.mrb[0].mxu0
    %v234 = vadd.f32 %v106, %v233
    %v235 = vpop.f32.mrb[0].mxu0
    %236 = vdwg.mxu0
    %vm237 = vcmp.gt.f32.partialorder %v234, 0.0
    %v238 = vmul.f32 %v234, 0.1
    %v239 = vsel %vm237, %v234, %v238
    %v240 = vld [vmem:[#allocation7] sm:$0xff]
    %v241 = vld [vmem:[#allocation7 + $0x8] sm:$0xff]
    %v242 = vld [vmem:[#allocation7 + $0x10] sm:$0xff]
    %v243 = vld [vmem:[#allocation7 + $0x18] sm:$0xff]
    %v244 = vld [vmem:[#allocation7 + $0x20] sm:$0xff]
    %v245 = vld [vmem:[#allocation7 + $0x28] sm:$0xff]
    %v246 = vld [vmem:[#allocation7 + $0x30] sm:$0xff]
    %v247 = vld [vmem:[#allocation7 + $0x38] sm:$0xff]
    %v248 = vld [vmem:[#allocation7 + $0x40] sm:$0xff]
    %v249 = vld [vmem:[#allocation7 + $0x48] sm:$0xff]
    %v250 = vld [vmem:[#allocation7 + $0x50] sm:$0xff]
    %v251 = vld [vmem:[#allocation7 + $0x58] sm:$0xff]
    %v252 = vld [vmem:[#allocation7 + $0x60] sm:$0xff]
    %v253 = vld [vmem:[#allocation7 + $0x68] sm:$0xff]
    %v254 = vld [vmem:[#allocation7 + $0x70] sm:$0xff]
    %v255 = vld [vmem:[#allocation7 + $0x78] sm:$0xff]
    %v256 = vld [vmem:[%s4] sm:$0x1]
    %v258 = vlaneseq
    %v259 = vshrl.u32 %v258, 7
    %v260 = vsub.s32 0, %v259
    %v261 = vrot.slane %v256, %v260
    %263 = vmatprep.subr.mxu0 0.0
    %264 = vmatpush1.msra.mxu0 %v240
    %265 = vmatprep.subr.mxu0 0.0
    %266 = vmatpush1.msra.mxu0 %v241
    %267 = vmatprep.subr.mxu0 0.0
    %268 = vmatpush1.msra.mxu0 %v242
    %269 = vmatprep.subr.mxu0 0.0
    %270 = vmatpush1.msra.mxu0 %v243
    %271 = vmatprep.subr.mxu0 0.0
    %272 = vmatpush1.msra.mxu0 %v244
    %273 = vmatprep.subr.mxu0 0.0
    %274 = vmatpush1.msra.mxu0 %v245
    %275 = vmatprep.subr.mxu0 0.0
    %276 = vmatpush1.msra.mxu0 %v246
    %277 = vmatprep.subr.mxu0 0.0
    %278 = vmatpush1.msra.mxu0 %v247
    %279 = vmatprep.subr.mxu0 0.0
    %280 = vmatpush1.msra.mxu0 %v248
    %281 = vmatprep.subr.mxu0 0.0
    %282 = vmatpush1.msra.mxu0 %v249
    %283 = vmatprep.subr.mxu0 0.0
    %284 = vmatpush1.msra.mxu0 %v250
    %285 = vmatprep.subr.mxu0 0.0
    %286 = vmatpush1.msra.mxu0 %v251
    %287 = vmatprep.subr.mxu0 0.0
    %288 = vmatpush1.msra.mxu0 %v252
    %289 = vmatprep.subr.mxu0 0.0
    %290 = vmatpush1.msra.mxu0 %v253
    %291 = vmatprep.subr.mxu0 0.0
    %292 = vmatpush1.msra.mxu0 %v254
    %293 = vmatprep.subr.mxu0 0.0
    %294 = vmatpush1.msra.mxu0 %v255
    %295 = vmatprep.subr.mxu0 0.0
    %296 = vmatpush1.msra.mxu0 0.0
    %297 = vmatprep.subr.mxu0 0.0
    %298 = vmatpush1.msra.mxu0 0.0
    %299 = vmatprep.subr.mxu0 0.0
    %300 = vmatpush1.msra.mxu0 0.0
    %301 = vmatprep.subr.mxu0 0.0
    %302 = vmatpush1.msra.mxu0 0.0
    %303 = vmatprep.subr.mxu0 0.0
    %304 = vmatpush1.msra.mxu0 0.0
    %305 = vmatprep.subr.mxu0 0.0
    %306 = vmatpush1.msra.mxu0 0.0
    %307 = vmatprep.subr.mxu0 0.0
    %308 = vmatpush1.msra.mxu0 0.0
    %309 = vmatprep.subr.mxu0 0.0
    %310 = vmatpush1.msra.mxu0 0.0
    %311 = vmatprep.subr.mxu0 0.0
    %312 = vmatpush1.msra.mxu0 0.0
    %313 = vmatprep.subr.mxu0 0.0
    %314 = vmatpush1.msra.mxu0 0.0
    %315 = vmatprep.subr.mxu0 0.0
    %316 = vmatpush1.msra.mxu0 0.0
    %317 = vmatprep.subr.mxu0 0.0
    %318 = vmatpush1.msra.mxu0 0.0
    %319 = vmatprep.subr.mxu0 0.0
    %320 = vmatpush1.msra.mxu0 0.0
    %321 = vmatprep.subr.mxu0 0.0
    %322 = vmatpush1.msra.mxu0 0.0
    %323 = vmatprep.subr.mxu0 0.0
    %324 = vmatpush1.msra.mxu0 0.0
    %325 = vmatprep.subr.mxu0 0.0
    %326 = vmatpush1.msra.mxu0 0.0
    %327 = vmatprep.mubr.f32.mxu0 0.0
    %328 = vmatmul.mubr.f32.gmra.mrb[0].mxu0 %v239
    %v329 = vpop.f32.mrb[0].mxu0
    %v330 = vadd.f32 %v261, %v329
    %v331 = vpop.f32.mrb[0].mxu0
    %332 = vdwg.mxu0
    %333 = vst [vmem:[#allocation8] sm:$0xff] %v330
    // Predicated region
    $region34: #{tpu_custom_call.1} parent=1 // pred_check
      _
    $region35: #{tpu_custom_call.1} parent=1 // pred_check_branch
      %335 = sbr.rel (0) target = $region37
    $region36: #{tpu_custom_call.1} parent=1 // pred_region
      %s337 = ssub.s32 128, 128
      %338 = vsyncadd [#allocation4], %s337
      %s340 = sshll.u32 [#allocation8], 4
      %s341 = int_to_ptr.vmem [resolvable:$true] %s340
      %343 = dma.vmem_to_hbm [thread:$0]  %s341, 128, %s5, [#allocation4]
    $region37: #{tpu_custom_call.1} parent=1 // pred_fallthru
      _
    // Predicated region
    $region38: #{tpu_custom_call.1} parent=1 // pred_check
      _
    $region39: #{tpu_custom_call.1} parent=1 // pred_check_branch
      %345 = sbr.rel (0) target = $region41
    $region40: #{tpu_custom_call.1} parent=1 // pred_region
      %346 = dma.done [#allocation4], 128
    $region41: #{tpu_custom_call.1} parent=1 // pred_fallthru
      _
    %347 = vsyncpa [#allocation3], 1
    %348 = vsyncpa [#allocation6], 1
    %349 = vsyncpa [#allocation4], 1

</llo_original>
